<compile_context>
chip_gen: v7x
topology: tpu7x:2x2x1
jax: 0.10.0
libtpu: 0.0.40
codegen_flags: <defaults>
</compile_context>

<pallas_src>
import math

import jax
import jax.numpy as jnp
from jax import lax
from jax.experimental import pallas as pl
from jax.experimental.pallas import tpu as pltpu


def _round_up(x, m):
    return (x + m - 1) // m * m


def _is_v5e():
    try:
        kind = jax.devices()[0].device_kind.lower()
        return ("v5e" in kind) or ("v5 lite" in kind) or ("v5lite" in kind)
    except Exception:
        return False


def _make_attn_kernel(scale, tk, needs_mask):
    """Build the flash-attention kernel body (scale / tk / needs_mask are static)."""

    def kernel(vlen_ref, q_ref, k_ref, v_ref, o_ref, qs_sc, m_sc, l_sc, acc_sc):
        # vlen_ref : SMEM (B,) int32   (scalar-prefetched valid lengths)
        # q_ref    : VMEM (1, tq, Dp)   compute dtype (bf16 by default)
        # k_ref    : VMEM (1, tk, Dp)
        # v_ref    : VMEM (1, tk, Dvp)
        # o_ref    : VMEM (1, tq, Dvp)  caller dtype
        # qs_sc    : VMEM (tq, Dp)      pre-scaled Q, persists across the K loop
        # m_sc/l_sc: VMEM (tq, 1) f32 ; acc_sc: VMEM (tq, Dvp) f32
        b = pl.program_id(0)
        ki = pl.program_id(2)

        @pl.when(ki == 0)
        def _init():
            # Hoist the 1/sqrt(d) scaling out of the K loop (once per Q tile),
            # applied in f32 so bf16 callers see no scale quantization error.
            qs_sc[...] = (q_ref[0].astype(jnp.float32) * scale).astype(qs_sc.dtype)
            m_sc[...] = jnp.full_like(m_sc, -jnp.inf)
            l_sc[...] = jnp.zeros_like(l_sc)
            acc_sc[...] = jnp.zeros_like(acc_sc)

        def body():
            k = k_ref[0]                       # (tk, Dp)
            v = v_ref[0]                       # (tk, Dvp)
            # scores = qs @ k^T, contraction expressed directly; f32 accumulation.
            scores = lax.dot_general(
                qs_sc[...], k,
                dimension_numbers=(((1,), (1,)), ((), ())),
                preferred_element_type=jnp.float32)          # (tq, tk) f32

            if needs_mask:
                # positions >= valid_len get -1e6 (like d2l.sequence_mask).
                # VALU-only; free filler next to the MXU/EUP critical slots.
                vlen = vlen_ref[b]
                col = ki * tk + lax.broadcasted_iota(jnp.int32, scores.shape, 1)
                scores = jnp.where(col < vlen, scores, -1000000.0)

            # online-softmax update (all f32)
            m_prev = m_sc[...]
            m_new = jnp.maximum(m_prev, jnp.max(scores, axis=-1, keepdims=True))
            alpha = jnp.exp(m_prev - m_new)                  # 0 on the first K tile
            p = jnp.exp(scores - m_new)
            l_sc[...] = alpha * l_sc[...] + jnp.sum(p, axis=-1, keepdims=True)
            acc_sc[...] = alpha * acc_sc[...] + jnp.dot(
                p.astype(v.dtype), v, preferred_element_type=jnp.float32)
            m_sc[...] = m_new

        if needs_mask:
            # Skip K tiles that are entirely beyond valid_len: no MXU / exp work.
            # max(vlen, 1) keeps tile 0 alive so l never finalizes at 0.
            # TODO(synk): valid_len == 0 degenerate case keeps the old (uniform over
            # padded keys) behavior instead of d2l's uniform-over-real-keys.
            vlen = vlen_ref[b]
            pl.when(ki * tk < jnp.maximum(vlen, 1))(body)
        else:
            body()

        @pl.when(ki == pl.num_programs(2) - 1)
        def _finalize():
            inv_l = pl.reciprocal(l_sc[...], approx=True)    # EUP, ~free
            # TODO(synk): nn.Dropout is identity in eval mode / p=0, so no dropout.
            o_ref[0] = (acc_sc[...] * inv_l).astype(o_ref.dtype)

    return kernel


def dot_product_attention(queries, keys, values, valid_lens=None, *,
                          mxu_dtype=jnp.bfloat16):
    """Pallas TPU implementation of DotProductAttention.forward (eval mode).

    Output dtype matches queries.dtype. Matmuls run in `mxu_dtype` (bf16 default,
    f32 accumulation); pass mxu_dtype=jnp.float32 for exact-f32 matmuls.
    """
    B, Q, D = queries.shape
    _, K, _ = keys.shape
    Dv = values.shape[-1]
    out_dtype = queries.dtype
    compute_dtype = jnp.dtype(mxu_dtype)
    v5e = _is_v5e()

    # --- tile sizes (16 grain: bf16 packs 16 sublanes per vreg) ---------------------
    if Q >= 256:
        tq = 256                # halves K/V re-streaming from HBM for long Q
        tk_cap = 128            # keep (tq, tk) f32 scores at <= 128 KiB (32 vregs)
    else:
        tq = min(128, _round_up(Q, 16))
        tk_cap = 128 if v5e else 256
    if B == 1 and Q > 16:
        tq = max(16, _round_up(tq // 2, 16))   # give both v7x TensorCores Q tiles

    if K <= 128:
        tk = _round_up(K, 16)
    else:
        tk = min(tk_cap, _round_up(K, 128))    # 128-multiple -> lane-dense P@V

    Q_pad = _round_up(Q, tq)
    K_pad = _round_up(K, tk)
    D_pad = _round_up(D, 128)                  # lane-dense contraction dim
    Dv_pad = _round_up(Dv, 128)                # lane-dense output -> full vst stores
    nq = Q_pad // tq
    nk = K_pad // tk

    # --- valid lens / masking -------------------------------------------------------
    needs_mask = (valid_lens is not None) or (K_pad > K)
    if valid_lens is None:
        valid_lens = jnp.full((B,), K, dtype=jnp.int32)
    # TODO(synk): 2-D (per-query) valid_lens variant of masked_softmax not supported.
    valid_lens = jnp.minimum(valid_lens.astype(jnp.int32), K)

    # --- zero-pad + cast to MXU dtype (zeros don't change dot products) --------------
    q_p = jnp.pad(queries, ((0, 0), (0, Q_pad - Q), (0, D_pad - D))).astype(compute_dtype)
    k_p = jnp.pad(keys, ((0, 0), (0, K_pad - K), (0, D_pad - D))).astype(compute_dtype)
    v_p = jnp.pad(values, ((0, 0), (0, K_pad - K), (0, Dv_pad - Dv))).astype(compute_dtype)

    kernel = _make_attn_kernel(1.0 / math.sqrt(D), tk, needs_mask)

    grid_spec = pltpu.PrefetchScalarGridSpec(
        num_scalar_prefetch=1,                 # valid_lens lands in SMEM
        grid=(B, nq, nk),
        in_specs=[
            pl.BlockSpec((1, tq, D_pad), lambda b, qi, ki, vl: (b, qi, 0)),
            pl.BlockSpec((1, tk, D_pad), lambda b, qi, ki, vl: (b, ki, 0)),
            pl.BlockSpec((1, tk, Dv_pad), lambda b, qi, ki, vl: (b, ki, 0)),
        ],
        out_specs=pl.BlockSpec((1, tq, Dv_pad), lambda b, qi, ki, vl: (b, qi, 0)),
        scratch_shapes=[
            pltpu.VMEM((tq, D_pad), compute_dtype),   # pre-scaled Q
            pltpu.VMEM((tq, 1), jnp.float32),         # running max m
            pltpu.VMEM((tq, 1), jnp.float32),         # running denom l
            pltpu.VMEM((tq, Dv_pad), jnp.float32),    # f32 accumulator
        ],
    )

    # --- VMEM budget: always set the scoped limit (v5e default is only 16 MiB),
    #     capped below the 64 MiB physical VMEM of a v7x TensorCore.
    cbytes = jnp.dtype(compute_dtype).itemsize
    obytes = jnp.dtype(out_dtype).itemsize
    vmem_est = (2 * (tq * D_pad + tk * D_pad + tk * Dv_pad) * cbytes   # dbl-buffered ins
                + 2 * tq * Dv_pad * obytes                              # dbl-buffered out
                + tq * D_pad * cbytes + (2 * tq + tq * Dv_pad) * 4      # scratch
                + 2 * tq * tk * 4)                                      # scores / p
    vmem_limit = int(min(max(2 * vmem_est, 32 << 20), 48 << 20))

    out_padded = pl.pallas_call(
        kernel,
        out_shape=jax.ShapeDtypeStruct((B, Q_pad, Dv_pad), out_dtype),
        grid_spec=grid_spec,
        compiler_params=pltpu.CompilerParams(
            dimension_semantics=("parallel", "parallel", "arbitrary"),
            vmem_limit_bytes=vmem_limit),
    )(valid_lens, q_p, k_p, v_p)

    return out_padded[:, :Q, :Dv]


def _reference(queries, keys, values, valid_lens):
    d = queries.shape[-1]
    scores = jnp.einsum("bqd,bkd->bqk", queries, keys) / math.sqrt(d)
    K = keys.shape[1]
    mask = jnp.arange(K)[None, None, :] < valid_lens[:, None, None]
    scores = jnp.where(mask, scores, -1000000.0)
    w = jax.nn.softmax(scores, axis=-1)
    return jnp.einsum("bqk,bkv->bqv", w, values)


if __name__ == "__main__":
    # small shapes consistent with the d2l DotProductAttention usage:
    #   queries (2, 4, 8), keys (2, 10, 8), values (2, 10, 4), valid_lens [2, 6]
    B, Q, K, D, Dv = 2, 4, 10, 8, 4
    key = jax.random.PRNGKey(0)
    kq, kk = jax.random.split(key)
    queries = jax.random.normal(kq, (B, Q, D), dtype=jnp.float32)
    keys = jax.random.normal(kk, (B, K, D), dtype=jnp.float32)
    values = jnp.tile(
        jnp.arange(K * Dv, dtype=jnp.float32).reshape(1, K, Dv), (B, 1, 1)
    )
    valid_lens = jnp.array([2, 6], dtype=jnp.int32)
    ref = _reference(queries, keys, values, valid_lens)

    # f32 inputs, default bf16-MXU compute path
    out = dot_product_attention(queries, keys, values, valid_lens)
    jax.block_until_ready(out)
    assert out.shape == (B, Q, Dv)
    assert out.dtype == queries.dtype
    assert jnp.allclose(out, ref, atol=1e-1, rtol=5e-2), "bf16-MXU path mismatch"

    # exact-f32 matmul path
    out_f32 = dot_product_attention(queries, keys, values, valid_lens,
                                    mxu_dtype=jnp.float32)
    jax.block_until_ready(out_f32)
    assert jnp.allclose(out_f32, ref, atol=2e-2, rtol=2e-2), "f32 path mismatch"

    # bf16 inputs -> bf16 outputs
    out_bf16 = dot_product_attention(
        queries.astype(jnp.bfloat16), keys.astype(jnp.bfloat16),
        values.astype(jnp.bfloat16), valid_lens)
    jax.block_until_ready(out_bf16)
    assert out_bf16.dtype == jnp.bfloat16
    assert float(jnp.max(jnp.abs(out_bf16.astype(jnp.float32) - ref))) < 1.0

    # no-mask path (valid_lens=None)
    out_nomask = dot_product_attention(queries, keys, values, None)
    jax.block_until_ready(out_nomask)
    ref_nomask = _reference(queries, keys, values, jnp.full((B,), K, jnp.int32))
    assert jnp.allclose(out_nomask, ref_nomask, atol=1e-1, rtol=5e-2)

    print("KERNEL_OK")
</pallas_src>

<mosaic_0001>
module attributes {stable_mosaic.version = 11 : i64} {
  func.func @kernel(%arg0: i32, %arg1: i32, %arg2: i32, %arg3: memref<2xi32, #tpu.memory_space<smem>>, %arg4: memref<1x16x128xbf16, #tpu.memory_space<vmem>>, %arg5: memref<1x16x128xbf16, #tpu.memory_space<vmem>>, %arg6: memref<1x16x128xbf16, #tpu.memory_space<vmem>>, %arg7: memref<1x16x128xf32, #tpu.memory_space<vmem>>, %arg8: memref<16x128xbf16, #tpu.memory_space<vmem>>, %arg9: memref<16x1xf32, #tpu.memory_space<vmem>>, %arg10: memref<16x1xf32, #tpu.memory_space<vmem>>, %arg11: memref<16x128xf32, #tpu.memory_space<vmem>>) attributes {dimension_semantics = [#tpu.dimension_semantics<parallel>, #tpu.dimension_semantics<parallel>, #tpu.dimension_semantics<arbitrary>], iteration_bounds = array<i64: 2, 1, 1>, scalar_prefetch = 1 : i64, scratch_operands = 4 : i64, tpu.core_type = #tpu.core_type<tc>, window_params = [{transform_indices = @transform_0, window_bounds = array<i64: 1, 16, 128>}, {transform_indices = @transform_1, window_bounds = array<i64: 1, 16, 128>}, {transform_indices = @transform_2, window_bounds = array<i64: 1, 16, 128>}, {transform_indices = @transform_3, window_bounds = array<i64: 1, 16, 128>}]} {
    %c0_i32 = arith.constant 0 : i32
    %0 = arith.cmpi eq, %arg2, %c0_i32 : i32
    %1 = arith.extui %0 : i1 to i32
    %c0_i32_0 = arith.constant 0 : i32
    %2 = arith.cmpi ne, %1, %c0_i32_0 : i32
    scf.if %2 {
      %c0 = arith.constant 0 : index
      %c0_4 = arith.constant 0 : index
      %c0_5 = arith.constant 0 : index
      %13 = vector.load %arg4[%c0, %c0_4, %c0_5] : memref<1x16x128xbf16, #tpu.memory_space<vmem>>, vector<1x16x128xbf16>
      %14 = vector.shape_cast %13 : vector<1x16x128xbf16> to vector<16x128xbf16>
      %15 = arith.extf %14 : vector<16x128xbf16> to vector<16x128xf32>
      %cst = arith.constant 0.353553385 : f32
      %16 = vector.broadcast %cst : f32 to vector<16x128xf32>
      %17 = arith.mulf %15, %16 : vector<16x128xf32>
      %18 = arith.truncf %17 : vector<16x128xf32> to vector<16x128xbf16>
      %c0_6 = arith.constant 0 : index
      %c0_7 = arith.constant 0 : index
      %19 = vector.load %arg8[%c0_6, %c0_7] : memref<16x128xbf16, #tpu.memory_space<vmem>>, vector<16x128xbf16>
      tpu.vector_store %arg8[%c0_6, %c0_7], %18 {strides = array<i32>} : memref<16x128xbf16, #tpu.memory_space<vmem>>, vector<16x128xbf16>,
      %cst_8 = arith.constant 0xFF800000 : f32
      %20 = vector.broadcast %cst_8 : f32 to vector<16x1xf32>
      %c0_9 = arith.constant 0 : index
      %c0_10 = arith.constant 0 : index
      %21 = vector.load %arg9[%c0_9, %c0_10] : memref<16x1xf32, #tpu.memory_space<vmem>>, vector<16x1xf32>
      tpu.vector_store %arg9[%c0_9, %c0_10], %20 {strides = array<i32>} : memref<16x1xf32, #tpu.memory_space<vmem>>, vector<16x1xf32>,
      %cst_11 = arith.constant 0.000000e+00 : f32
      %22 = vector.broadcast %cst_11 : f32 to vector<16x1xf32>
      %c0_12 = arith.constant 0 : index
      %c0_13 = arith.constant 0 : index
      %23 = vector.load %arg10[%c0_12, %c0_13] : memref<16x1xf32, #tpu.memory_space<vmem>>, vector<16x1xf32>
      tpu.vector_store %arg10[%c0_12, %c0_13], %22 {strides = array<i32>} : memref<16x1xf32, #tpu.memory_space<vmem>>, vector<16x1xf32>,
      %cst_14 = arith.constant 0.000000e+00 : f32
      %24 = vector.broadcast %cst_14 : f32 to vector<16x128xf32>
      %c0_15 = arith.constant 0 : index
      %c0_16 = arith.constant 0 : index
      %25 = vector.load %arg11[%c0_15, %c0_16] : memref<16x128xf32, #tpu.memory_space<vmem>>, vector<16x128xf32>
      tpu.vector_store %arg11[%c0_15, %c0_16], %24 {strides = array<i32>} : memref<16x128xf32, #tpu.memory_space<vmem>>, vector<16x128xf32>,
    } else {
    }
    %3 = arith.index_cast %arg0 : i32 to index
    %4 = memref.load %arg3[%3] : memref<2xi32, #tpu.memory_space<smem>>
    %c16_i32 = arith.constant 16 : i32
    %5 = arith.muli %arg2, %c16_i32 : i32
    %c1_i32 = arith.constant 1 : i32
    %6 = arith.maxsi %4, %c1_i32 : i32
    %7 = arith.cmpi slt, %5, %6 : i32
    %8 = arith.extui %7 : i1 to i32
    %c0_i32_1 = arith.constant 0 : i32
    %9 = arith.cmpi ne, %8, %c0_i32_1 : i32
    scf.if %9 {
      %c0 = arith.constant 0 : index
      %c0_4 = arith.constant 0 : index
      %c0_5 = arith.constant 0 : index
      %13 = vector.load %arg5[%c0, %c0_4, %c0_5] : memref<1x16x128xbf16, #tpu.memory_space<vmem>>, vector<1x16x128xbf16>
      %14 = vector.shape_cast %13 : vector<1x16x128xbf16> to vector<16x128xbf16>
      %c0_6 = arith.constant 0 : index
      %c0_7 = arith.constant 0 : index
      %c0_8 = arith.constant 0 : index
      %15 = vector.load %arg6[%c0_6, %c0_7, %c0_8] : memref<1x16x128xbf16, #tpu.memory_space<vmem>>, vector<1x16x128xbf16>
      %16 = vector.shape_cast %15 : vector<1x16x128xbf16> to vector<16x128xbf16>
      %c0_9 = arith.constant 0 : index
      %c0_10 = arith.constant 0 : index
      %17 = vector.load %arg8[%c0_9, %c0_10] : memref<16x128xbf16, #tpu.memory_space<vmem>>, vector<16x128xbf16>
      %cst = arith.constant dense<0.000000e+00> : vector<16x16xf32>
      %18 = tpu.matmul %17, %14, %cst {dimension_numbers = #tpu.dot_dimension_numbers<[1], [1], [0], [0], [0, 0, 1, 0], [], []>} : vector<16x128xbf16>, vector<16x128xbf16>, vector<16x16xf32> -> vector<16x16xf32>
      %19 = arith.index_cast %arg0 : i32 to index
      %20 = memref.load %arg3[%19] : memref<2xi32, #tpu.memory_space<smem>>
      %c16_i32_11 = arith.constant 16 : i32
      %21 = arith.muli %arg2, %c16_i32_11 : i32
      %22 = tpu.iota {dimensions = array<i32: 1>} : vector<16x16xi32>
      %23 = vector.broadcast %21 : i32 to vector<16x16xi32>
      %24 = arith.addi %23, %22 : vector<16x16xi32>
      %25 = vector.broadcast %20 : i32 to vector<16x16xi32>
      %26 = arith.cmpi slt, %24, %25 : vector<16x16xi32>
      %cst_12 = arith.constant -1.000000e+06 : f32
      %27 = vector.broadcast %cst_12 : f32 to vector<16x16xf32>
      %28 = arith.select %26, %18, %27 : vector<16x16xi1>, vector<16x16xf32>
      %c0_13 = arith.constant 0 : index
      %c0_14 = arith.constant 0 : index
      %29 = vector.load %arg9[%c0_13, %c0_14] : memref<16x1xf32, #tpu.memory_space<vmem>>, vector<16x1xf32>
      %cst_15 = arith.constant dense<0xFF800000> : vector<16xf32>
      %30 = vector.multi_reduction <maximumf>, %28, %cst_15 [1] : vector<16x16xf32> to vector<16xf32>
      %31 = vector.shape_cast %30 : vector<16xf32> to vector<16x1xf32>
      %32 = arith.maximumf %29, %31 : vector<16x1xf32>
      %33 = arith.subf %29, %32 : vector<16x1xf32>
      %34 = math.exp %33 : vector<16x1xf32>
      %35 = vector.broadcast %32 : vector<16x1xf32> to vector<16x16xf32>
      %36 = arith.subf %28, %35 : vector<16x16xf32>
      %37 = math.exp %36 : vector<16x16xf32>
      %c0_16 = arith.constant 0 : index
      %c0_17 = arith.constant 0 : index
      %38 = vector.load %arg10[%c0_16, %c0_17] : memref<16x1xf32, #tpu.memory_space<vmem>>, vector<16x1xf32>
      %39 = arith.mulf %34, %38 : vector<16x1xf32>
      %cst_18 = arith.constant dense<0.000000e+00> : vector<16xf32>
      %40 = vector.multi_reduction <add>, %37, %cst_18 [1] : vector<16x16xf32> to vector<16xf32>
      %41 = vector.shape_cast %40 : vector<16xf32> to vector<16x1xf32>
      %42 = arith.addf %39, %41 : vector<16x1xf32>
      %c0_19 = arith.constant 0 : index
      %c0_20 = arith.constant 0 : index
      %43 = vector.load %arg10[%c0_19, %c0_20] : memref<16x1xf32, #tpu.memory_space<vmem>>, vector<16x1xf32>
      tpu.vector_store %arg10[%c0_19, %c0_20], %42 {strides = array<i32>} : memref<16x1xf32, #tpu.memory_space<vmem>>, vector<16x1xf32>,
      %c0_21 = arith.constant 0 : index
      %c0_22 = arith.constant 0 : index
      %44 = vector.load %arg11[%c0_21, %c0_22] : memref<16x128xf32, #tpu.memory_space<vmem>>, vector<16x128xf32>
      %45 = vector.broadcast %34 : vector<16x1xf32> to vector<16x128xf32>
      %46 = arith.mulf %45, %44 : vector<16x128xf32>
      %47 = arith.truncf %37 : vector<16x16xf32> to vector<16x16xbf16>
      %cst_23 = arith.constant dense<0.000000e+00> : vector<16x128xf32>
      %48 = tpu.matmul %47, %16, %cst_23 {dimension_numbers = #tpu.dot_dimension_numbers<[1], [0], [0], [1], [0, 0, 1, 1], [], []>} : vector<16x16xbf16>, vector<16x128xbf16>, vector<16x128xf32> -> vector<16x128xf32>
      %49 = arith.addf %46, %48 : vector<16x128xf32>
      %c0_24 = arith.constant 0 : index
      %c0_25 = arith.constant 0 : index
      %50 = vector.load %arg11[%c0_24, %c0_25] : memref<16x128xf32, #tpu.memory_space<vmem>>, vector<16x128xf32>
      tpu.vector_store %arg11[%c0_24, %c0_25], %49 {strides = array<i32>} : memref<16x128xf32, #tpu.memory_space<vmem>>, vector<16x128xf32>,
      %c0_26 = arith.constant 0 : index
      %c0_27 = arith.constant 0 : index
      %51 = vector.load %arg9[%c0_26, %c0_27] : memref<16x1xf32, #tpu.memory_space<vmem>>, vector<16x1xf32>
      tpu.vector_store %arg9[%c0_26, %c0_27], %32 {strides = array<i32>} : memref<16x1xf32, #tpu.memory_space<vmem>>, vector<16x1xf32>,
    } else {
    }
    %c0_i32_2 = arith.constant 0 : i32
    %10 = arith.cmpi eq, %arg2, %c0_i32_2 : i32
    %11 = arith.extui %10 : i1 to i32
    %c0_i32_3 = arith.constant 0 : i32
    %12 = arith.cmpi ne, %11, %c0_i32_3 : i32
    scf.if %12 {
      %c0 = arith.constant 0 : index
      %c0_4 = arith.constant 0 : index
      %13 = vector.load %arg10[%c0, %c0_4] : memref<16x1xf32, #tpu.memory_space<vmem>>, vector<16x1xf32>
      %14 = tpu.reciprocal %13 {approx = true} : vector<16x1xf32> -> vector<16x1xf32>
      %c0_5 = arith.constant 0 : index
      %c0_6 = arith.constant 0 : index
      %15 = vector.load %arg11[%c0_5, %c0_6] : memref<16x128xf32, #tpu.memory_space<vmem>>, vector<16x128xf32>
      %16 = vector.broadcast %14 : vector<16x1xf32> to vector<16x128xf32>
      %17 = arith.mulf %15, %16 : vector<16x128xf32>
      %c0_7 = arith.constant 0 : index
      %c0_8 = arith.constant 0 : index
      %c0_9 = arith.constant 0 : index
      %18 = vector.load %arg7[%c0_7, %c0_8, %c0_9] : memref<1x16x128xf32, #tpu.memory_space<vmem>>, vector<1x16x128xf32>
      %19 = vector.shape_cast %18 : vector<1x16x128xf32> to vector<16x128xf32>
      %20 = vector.shape_cast %17 : vector<16x128xf32> to vector<1x16x128xf32>
      tpu.vector_store %arg7[%c0_7, %c0_8, %c0_9], %20 {strides = array<i32>} : memref<1x16x128xf32, #tpu.memory_space<vmem>>, vector<1x16x128xf32>,
    } else {
    }
    return
  }
  func.func @transform_0(%arg0: i32, %arg1: i32, %arg2: i32, %arg3: memref<2xi32, #tpu.memory_space<smem>>) -> (i32, i32, i32) {
    %c0_i32 = arith.constant 0 : i32
    %c0_i32_0 = arith.constant 0 : i32
    return %arg0, %arg1, %c0_i32 : i32, i32, i32
  }
  func.func @transform_1(%arg0: i32, %arg1: i32, %arg2: i32, %arg3: memref<2xi32, #tpu.memory_space<smem>>) -> (i32, i32, i32) {
    %c0_i32 = arith.constant 0 : i32
    %c0_i32_0 = arith.constant 0 : i32
    return %arg0, %arg2, %c0_i32 : i32, i32, i32
  }
  func.func @transform_2(%arg0: i32, %arg1: i32, %arg2: i32, %arg3: memref<2xi32, #tpu.memory_space<smem>>) -> (i32, i32, i32) {
    %c0_i32 = arith.constant 0 : i32
    %c0_i32_0 = arith.constant 0 : i32
    return %arg0, %arg2, %c0_i32 : i32, i32, i32
  }
  func.func @transform_3(%arg0: i32, %arg1: i32, %arg2: i32, %arg3: memref<2xi32, #tpu.memory_space<smem>>) -> (i32, i32, i32) {
    %c0_i32 = arith.constant 0 : i32
    %c0_i32_0 = arith.constant 0 : i32
    return %arg0, %arg1, %c0_i32 : i32, i32, i32
  }
}

</mosaic_0001>

<llo_original>
// kernel: tpu_custom_call.1
$region0: #{tpu_custom_call.1}
  #allocation0 [shape = 'u32[]', space=smem, size = 0x4, offset = 0x4, fixed_abs, tag = 'smem constant byte address 0x4 - core index']
  #allocation1 [shape = 'u32[144,128]{1,0:T(1,128)}', space=vmem, size = 0x12000, scoped, tag = 'internal scratch']
  #allocation2 [shape = 'bf16[16,128]{1,0:T(16,128)(2,1)}', space=vmem, size = 0x1000, scoped, tag = 'scratch operand']
  #allocation3 [shape = 'f32[16,1]{1,0:T(8,128)}', space=vmem, size = 0x2000, scoped, tag = 'scratch operand']
  #allocation4 [shape = 'f32[16,1]{1,0:T(8,128)}', space=vmem, size = 0x2000, scoped, tag = 'scratch operand']
  #allocation5 [shape = 'f32[16,128]{1,0:T(8,128)}', space=vmem, size = 0x2000, scoped, tag = 'scratch operand']
  #allocation6 [shape = 's32[1]{0}', space=sflag, size = 0x4, scoped, tag = 'scoped memory for tpu_custom_call.1']
  #allocation7 [shape = 'u8[512]{0}', space=smem, size = 0x200, scoped, tag = 'prefetched SMEM operand 0']
  %s0 = inlined_call_operand.hbm [shape: s32[2], index: 0, kind: input, shape index: {}]
  %s1 = inlined_call_operand.hbm [shape: bf16[2,16,128], index: 1, kind: input, shape index: {}]
  %s2 = inlined_call_operand.hbm [shape: bf16[2,16,128], index: 2, kind: input, shape index: {}]
  %s3 = inlined_call_operand.hbm [shape: bf16[2,16,128], index: 3, kind: input, shape index: {}]
  %s4 = inlined_call_operand.hbm [shape: f32[2,16,128], index: 4, kind: output, shape index: {}]
  %s5 = sld [smem:[#allocation0]]
  $region69: #{tpu_custom_call.1} parent=0
    _
  %s7 = ssub.s32 1, %s5
  %s8 = scalar_select 0, %s7, %s5
  %10 = dma.hbm_to_smem %s0, 16, [#allocation7], [#allocation6]
  %11 = dma.done [#allocation6], 16
  %12 = sfence
  $region1: #{tpu_custom_call.1} parent=0
    #allocation8 [shape = 'u8[8192]{0}', space=vmem, size = 0x2000, scoped, tag = 'input window, operand 1']
    #allocation9 [shape = 's32[2]{0}', space=sflag, size = 0x8, scoped, tag = 'scoped memory for tpu_custom_call.1']
    #allocation10 [shape = 's32[2]{0}', space=sflag, size = 0x8, scoped, tag = 'scoped memory for tpu_custom_call.1']
    #allocation11 [shape = 'u8[8192]{0}', space=vmem, size = 0x2000, scoped, tag = 'input window, operand 2']
    #allocation12 [shape = 's32[2]{0}', space=sflag, size = 0x8, scoped, tag = 'scoped memory for tpu_custom_call.1']
    #allocation13 [shape = 'u8[8192]{0}', space=vmem, size = 0x2000, scoped, tag = 'input window, operand 3']
    #allocation14 [shape = 'u8[16384]{0}', space=vmem, size = 0x4000, scoped, tag = 'output window, operand 0']
    %13 = vsyncpa [#allocation9], 0
    %s14 = scalar_lea.sflag [#allocation9], 1
    %15 = vsyncpa %s14, 0
    %16 = vsyncpa [#allocation12], 0
    %s17 = scalar_lea.sflag [#allocation12], 1
    %18 = vsyncpa %s17, 0
    %19 = vsyncpa [#allocation10], 0
    %s20 = scalar_lea.sflag [#allocation10], 1
    %21 = vsyncpa %s20, 0
    loop: start=0, step=1, limit=4
    $region2: #{tpu_custom_call.1} parent=1 // loop_pre_header
      _
    $region3: #{tpu_custom_call.1} parent=1 // loop_header
      %s23 = sphi 0, %s27
      %p24 = scmp.ge.s32.totalorder %s23, 4
      %s30 = sphi 0, %s49
      %s31 = sphi 0, %s45
      %s32 = sphi 0, %s41
      %s33 = sphi 0, %s30
      %s34 = sphi 0, %s31
      %s35 = sphi 0, %s32
      %s36 = sphi 0, %s33
      %s37 = sphi 0, %s34
      %s38 = sphi 0, %s35
      %s54 = sphi 0, %s56
      %s57 = sphi 0, %s54
      %s58 = sphi 0, %s57
      %s74 = sphi 0, %s58
      %s82 = sphi 0, %s84
      %s85 = sphi 0, %s82
      %s86 = sphi 0, %s85
      %s102 = sphi 0, %s86
      %s110 = sphi 0, %s112
      %s113 = sphi 0, %s110
      %s114 = sphi 0, %s113
      %s130 = sphi 0, %s114
      %s138 = sphi 0, %s140
      %s141 = sphi 0, %s138
      %s142 = sphi 0, %s141
      %s158 = sphi 0, %s142
    $region4: #{tpu_custom_call.1} parent=1 // loop_header_branch
      %26 = sbr.rel (%p24) target = $region8
    $region5: #{tpu_custom_call.1} parent=1 // loop_body
      %s28 = ssub.s32 %s23, 1
      %s29 = ssub.s32 %s23, 2
      %s39 = sadd.s32 1, %s32
      %p40 = scmp.ge.s32.totalorder %s39, 1
      %s41 = scalar_select %p40, 0, %s39
      %s42 = sadd.s32 1, %s31
      %s43 = scalar_select %p40, %s42, %s31
      %p44 = scmp.ge.s32.totalorder %s43, 1
      %s45 = scalar_select %p44, 0, %s43
      %s46 = sadd.s32 1, %s30
      %s47 = scalar_select %p44, %s46, %s30
      %p48 = scmp.ge.s32.totalorder %s47, 2
      %s49 = scalar_select %p48, 0, %s47
      %s50 = ssub.s32 %s30, %s49
      %s51 = ssub.s32 %s31, %s45
      %s52 = sor.u32 %s50, %s51
      %p53 = scmp.eq.s32.totalorder %s52, 0
      %s55 = sadd.s32 %s54, 1
      %s56 = scalar_select %p53, %s54, %s55
      %p59 = pneg %p53
      %p60 = scmp.eq.s32.totalorder %s23, 1
      %p61 = por %p59, %p60
      %p62 = scmp.ne.s32.totalorder %s54, %s57
      %p63 = scmp.eq.s32.totalorder %s23, 0
      %p64 = por %p62, %p63
      %p65 = scmp.ne.s32.totalorder %s54, %s57
      %p66 = scmp.eq.s32.totalorder %s28, 1
      %p67 = por %p65, %p66
      %p68 = scmp.ne.s32.totalorder %s57, %s58
      %p69 = scmp.eq.s32.totalorder %s28, 0
      %p70 = por %p68, %p69
      %p71 = scmp.ne.s32.totalorder %s57, %s58
      %p72 = scmp.eq.s32.totalorder %s29, 1
      %p73 = por %p71, %p72
      %p75 = scmp.ne.s32.totalorder %s58, %s74
      %p76 = scmp.eq.s32.totalorder %s29, 0
      %p77 = por %p75, %p76
      %s78 = ssub.s32 %s30, %s49
      %s79 = ssub.s32 %s32, %s41
      %s80 = sor.u32 %s78, %s79
      %p81 = scmp.eq.s32.totalorder %s80, 0
      %s83 = sadd.s32 %s82, 1
      %s84 = scalar_select %p81, %s82, %s83
      %p87 = pneg %p81
      %p88 = scmp.eq.s32.totalorder %s23, 1
      %p89 = por %p87, %p88
      %p90 = scmp.ne.s32.totalorder %s82, %s85
      %p91 = scmp.eq.s32.totalorder %s23, 0
      %p92 = por %p90, %p91
      %p93 = scmp.ne.s32.totalorder %s82, %s85
      %p94 = scmp.eq.s32.totalorder %s28, 1
      %p95 = por %p93, %p94
      %p96 = scmp.ne.s32.totalorder %s85, %s86
      %p97 = scmp.eq.s32.totalorder %s28, 0
      %p98 = por %p96, %p97
      %p99 = scmp.ne.s32.totalorder %s85, %s86
      %p100 = scmp.eq.s32.totalorder %s29, 1
      %p101 = por %p99, %p100
      %p103 = scmp.ne.s32.totalorder %s86, %s102
      %p104 = scmp.eq.s32.totalorder %s29, 0
      %p105 = por %p103, %p104
      %s106 = ssub.s32 %s30, %s49
      %s107 = ssub.s32 %s32, %s41
      %s108 = sor.u32 %s106, %s107
      %p109 = scmp.eq.s32.totalorder %s108, 0
      %s111 = sadd.s32 %s110, 1
      %s112 = scalar_select %p109, %s110, %s111
      %p115 = pneg %p109
      %p116 = scmp.eq.s32.totalorder %s23, 1
      %p117 = por %p115, %p116
      %p118 = scmp.ne.s32.totalorder %s110, %s113
      %p119 = scmp.eq.s32.totalorder %s23, 0
      %p120 = por %p118, %p119
      %p121 = scmp.ne.s32.totalorder %s110, %s113
      %p122 = scmp.eq.s32.totalorder %s28, 1
      %p123 = por %p121, %p122
      %p124 = scmp.ne.s32.totalorder %s113, %s114
      %p125 = scmp.eq.s32.totalorder %s28, 0
      %p126 = por %p124, %p125
      %p127 = scmp.ne.s32.totalorder %s113, %s114
      %p128 = scmp.eq.s32.totalorder %s29, 1
      %p129 = por %p127, %p128
      %p131 = scmp.ne.s32.totalorder %s114, %s130
      %p132 = scmp.eq.s32.totalorder %s29, 0
      %p133 = por %p131, %p132
      %s134 = ssub.s32 %s30, %s49
      %s135 = ssub.s32 %s31, %s45
      %s136 = sor.u32 %s134, %s135
      %p137 = scmp.eq.s32.totalorder %s136, 0
      %s139 = sadd.s32 %s138, 1
      %s140 = scalar_select %p137, %s138, %s139
      %p143 = pneg %p137
      %p144 = scmp.eq.s32.totalorder %s23, 1
      %p145 = por %p143, %p144
      %p146 = scmp.ne.s32.totalorder %s138, %s141
      %p147 = scmp.eq.s32.totalorder %s23, 0
      %p148 = por %p146, %p147
      %p149 = scmp.ne.s32.totalorder %s138, %s141
      %p150 = scmp.eq.s32.totalorder %s28, 1
      %p151 = por %p149, %p150
      %p152 = scmp.ne.s32.totalorder %s141, %s142
      %p153 = scmp.eq.s32.totalorder %s28, 0
      %p154 = por %p152, %p153
      %p155 = scmp.ne.s32.totalorder %s141, %s142
      %p156 = scmp.eq.s32.totalorder %s29, 1
      %p157 = por %p155, %p156
      %p159 = scmp.ne.s32.totalorder %s142, %s158
      %p160 = scmp.eq.s32.totalorder %s29, 0
      %p161 = por %p159, %p160
      %p162 = scmp.le.s32.totalorder 1, %s23
      %p163 = scmp.lt.s32.totalorder %s23, 3
      %p164 = pnand %p162, %p163
      %p165 = pneg %p164
      // Predicated region
      $region9: #{tpu_custom_call.1} parent=5 // pred_check
        _
      $region10: #{tpu_custom_call.1} parent=5 // pred_check_branch
        %167 = sbr.rel (%p164) target = $region12
      $region11: #{tpu_custom_call.1} parent=5 // pred_region
        %s168 = ssub.s32 %s23, 1
      $region12: #{tpu_custom_call.1} parent=5 // pred_fallthru
        _
      %p169 = scmp.lt.s32.totalorder %s23, 2
      // Predicated region
      $region13: #{tpu_custom_call.1} parent=5 // pred_check
        %p170 = pneg %p169
      $region14: #{tpu_custom_call.1} parent=5 // pred_check_branch
        %172 = sbr.rel (%p170) target = $region16
      $region15: #{tpu_custom_call.1} parent=5 // pred_region
        // Predicated region
        $region17: #{tpu_custom_call.1} parent=15 // pred_check
          %p173 = pneg %p64
        $region18: #{tpu_custom_call.1} parent=15 // pred_check_branch
          %175 = sbr.rel (%p173) target = $region20
        $region19: #{tpu_custom_call.1} parent=15 // pred_region
          %s176 = sand.u32 %s54, 1
          %s177 = scalar_lea.sflag [#allocation9], %s176
          %s178 = sand.u32 %s54, 1
          %s179 = smul.addr %s178, 8
          %s180 = scalar_lea.vmem [#allocation8], %s179
          %s181 = smul.u32 2, %s31
          %s183 = ssub.s32 128, 128
          %184 = vsyncadd %s177, %s183
          %s185 = smul.addr %s30, 2
          %s186 = sadd.s32 %s181, %s185
          %s187 = smul.addr %s186, 64
          %s188 = scalar_lea.hbm %s1, %s187
          %s189 = sshll.u32 %s180, 4
          %s190 = int_to_ptr.vmem [resolvable:$true] %s189
          %195 = dma.hbm_to_vmem [thread:$0]  %s188, 128, %s190, %s177, 64, 64, 4
        $region20: #{tpu_custom_call.1} parent=15 // pred_fallthru
          _
        // Predicated region
        $region21: #{tpu_custom_call.1} parent=15 // pred_check
          %p196 = pneg %p92
        $region22: #{tpu_custom_call.1} parent=15 // pred_check_branch
          %198 = sbr.rel (%p196) target = $region24
        $region23: #{tpu_custom_call.1} parent=15 // pred_region
          %s199 = sand.u32 %s23, 1
          %s200 = scalar_lea.sflag [#allocation12], %s199
          %s201 = sand.u32 %s82, 1
          %s202 = smul.addr %s201, 8
          %s203 = scalar_lea.vmem [#allocation11], %s202
          %s204 = smul.u32 2, %s32
          %s206 = ssub.s32 128, 128
          %207 = vsyncadd %s200, %s206
          %s208 = smul.addr %s30, 2
          %s209 = sadd.s32 %s204, %s208
          %s210 = smul.addr %s209, 64
          %s211 = scalar_lea.hbm %s2, %s210
          %s212 = sshll.u32 %s203, 4
          %s213 = int_to_ptr.vmem [resolvable:$true] %s212
          %218 = dma.hbm_to_vmem [thread:$0]  %s211, 128, %s213, %s200, 64, 64, 4
        $region24: #{tpu_custom_call.1} parent=15 // pred_fallthru
          _
        // Predicated region
        $region25: #{tpu_custom_call.1} parent=15 // pred_check
          %p219 = pneg %p120
        $region26: #{tpu_custom_call.1} parent=15 // pred_check_branch
          %221 = sbr.rel (%p219) target = $region28
        $region27: #{tpu_custom_call.1} parent=15 // pred_region
          %s222 = sand.u32 %s23, 1
          %s223 = scalar_lea.sflag [#allocation12], %s222
          %s224 = sand.u32 %s110, 1
          %s225 = smul.addr %s224, 8
          %s226 = scalar_lea.vmem [#allocation13], %s225
          %s227 = smul.u32 2, %s32
          %s229 = ssub.s32 128, 128
          %230 = vsyncadd %s223, %s229
          %s231 = smul.addr %s30, 2
          %s232 = sadd.s32 %s227, %s231
          %s233 = smul.addr %s232, 64
          %s234 = scalar_lea.hbm %s3, %s233
          %s235 = sshll.u32 %s226, 4
          %s236 = int_to_ptr.vmem [resolvable:$true] %s235
          %241 = dma.hbm_to_vmem [thread:$0]  %s234, 128, %s236, %s223, 64, 64, 4
        $region28: #{tpu_custom_call.1} parent=15 // pred_fallthru
          _
      $region16: #{tpu_custom_call.1} parent=5 // pred_fallthru
        _
      %p242 = scmp.le.s32.totalorder 1, %s23
      %p243 = scmp.lt.s32.totalorder %s23, 3
      %p244 = pnand %p242, %p243
      %p245 = pneg %p244
      // Predicated region
      $region29: #{tpu_custom_call.1} parent=5 // pred_check
        _
      $region30: #{tpu_custom_call.1} parent=5 // pred_check_branch
        %247 = sbr.rel (%p244) target = $region32
      $region31: #{tpu_custom_call.1} parent=5 // pred_region
        %s248 = ssub.s32 %s23, 1
        %s249 = sand.u32 %s57, 1
        %s250 = scalar_lea.sflag [#allocation9], %s249
        %s251 = sand.u32 %s57, 1
        %s252 = smul.addr %s251, 8
        %s253 = scalar_lea.vmem [#allocation8], %s252
        // Predicated region
        $region33: #{tpu_custom_call.1} parent=31 // pred_check
          %p254 = pneg %p70
        $region34: #{tpu_custom_call.1} parent=31 // pred_check_branch
          %256 = sbr.rel (%p254) target = $region36
        $region35: #{tpu_custom_call.1} parent=31 // pred_region
          %257 = dma.done %s250, 128
        $region36: #{tpu_custom_call.1} parent=31 // pred_fallthru
          _
        %s258 = sand.u32 %s28, 1
        %s259 = scalar_lea.sflag [#allocation12], %s258
        %s260 = sand.u32 %s85, 1
        %s261 = smul.addr %s260, 8
        %s262 = scalar_lea.vmem [#allocation11], %s261
        // Predicated region
        $region37: #{tpu_custom_call.1} parent=31 // pred_check
          %p263 = pneg %p98
        $region38: #{tpu_custom_call.1} parent=31 // pred_check_branch
          %265 = sbr.rel (%p263) target = $region40
        $region39: #{tpu_custom_call.1} parent=31 // pred_region
          %266 = dma.done %s259, 128
        $region40: #{tpu_custom_call.1} parent=31 // pred_fallthru
          _
        %s267 = sand.u32 %s28, 1
        %s268 = scalar_lea.sflag [#allocation12], %s267
        %s269 = sand.u32 %s113, 1
        %s270 = smul.addr %s269, 8
        %s271 = scalar_lea.vmem [#allocation13], %s270
        // Predicated region
        $region41: #{tpu_custom_call.1} parent=31 // pred_check
          %p272 = pneg %p126
        $region42: #{tpu_custom_call.1} parent=31 // pred_check_branch
          %274 = sbr.rel (%p272) target = $region44
        $region43: #{tpu_custom_call.1} parent=31 // pred_region
          %275 = dma.done %s268, 128
        $region44: #{tpu_custom_call.1} parent=31 // pred_fallthru
          _
        %s276 = sand.u32 %s57, 1
        %s277 = scalar_lea.sflag [#allocation9], %s276
        %s278 = sand.u32 %s57, 1
        %s279 = smul.addr %s278, 8
        %s280 = scalar_lea.vmem [#allocation8], %s279
        %p281 = pneg %p70
        %p282 = pneg %p67
        %s283 = sand.u32 %s28, 1
        %s284 = scalar_lea.sflag [#allocation12], %s283
        %s285 = sand.u32 %s85, 1
        %s286 = smul.addr %s285, 8
        %s287 = scalar_lea.vmem [#allocation11], %s286
        %p288 = pneg %p98
        %p289 = pneg %p95
        %s290 = sand.u32 %s28, 1
        %s291 = scalar_lea.sflag [#allocation12], %s290
        %s292 = sand.u32 %s113, 1
        %s293 = smul.addr %s292, 8
        %s294 = scalar_lea.vmem [#allocation13], %s293
        %p295 = pneg %p126
        %p296 = pneg %p123
        %p297 = pneg %p154
        %p298 = pneg %p151
        %s299 = sand.u32 %s141, 1
        %s300 = scalar_lea.sflag [#allocation10], %s299
        %s301 = sand.u32 %s141, 1
        %s302 = smul.addr %s301, 16
        %s303 = scalar_lea.vmem [#allocation14], %s302
        %s304 = smul.u32 2, %s34
        %s305 = smul.u32 2, %s35
        %s306 = smul.u32 2, %s35
        %s307 = smul.u32 2, %s34
        %p309 = scmp.eq.s32.totalorder %s35, 0
        // Predicated region
        $region45: #{tpu_custom_call.1} parent=31 // pred_check
          %p310 = pneg %p309
        $region46: #{tpu_custom_call.1} parent=31 // pred_check_branch
          %312 = sbr.rel (%p310) target = $region48
        $region47: #{tpu_custom_call.1} parent=31 // pred_region
          %v313 = vld [vmem:[%s253] sm:$0xf]
          %v314 = vld [vmem:[%s253 + $0x4] sm:$0xf]
          %v315 = vunpack.c.l.bf16 %v313
          %v316 = vunpack.c.l.bf16 %v314
          %v317 = vmul.f32 %v315, 0.35355338
          %v318 = vmul.f32 %v316, 0.35355338
          %v319 = vpack.c.bf16 %v318, %v317
          %320 = vst [vmem:[#allocation2] sm:$0xff] %v319
          %vm321 = vcmask 7168
          %322 = vst.msk [vmem:[#allocation3] sm:$0xff] %vm321, -inf
          %323 = vst.msk [vmem:[#allocation3 + $0x8] sm:$0xff] %vm321, -inf
          %324 = vst.msk [vmem:[#allocation4] sm:$0xff] %vm321, 0.0
          %325 = vst.msk [vmem:[#allocation4 + $0x8] sm:$0xff] %vm321, 0.0
          %326 = vst [vmem:[#allocation5] sm:$0xff] 0.0
          %327 = vst [vmem:[#allocation5 + $0x8] sm:$0xff] 0.0
        $region48: #{tpu_custom_call.1} parent=31 // pred_fallthru
          _
        %s328 = sld [smem:[#allocation7 + %s33]]
        %s329 = smul.u32 %s35, 16
        %p330 = scmp.gt.s32.totalorder %s328, 1
        %s331 = scalar_select %p330, %s328, 1
        %p332 = scmp.lt.s32.totalorder %s329, %s331
        // Predicated region
        $region49: #{tpu_custom_call.1} parent=31 // pred_check
          %p333 = pneg %p332
        $region50: #{tpu_custom_call.1} parent=31 // pred_check_branch
          %335 = sbr.rel (%p333) target = $region52
        $region51: #{tpu_custom_call.1} parent=31 // pred_region
          %v336 = vld [vmem:[%s262] sm:$0xf]
          %v337 = vld [vmem:[%s262 + $0x4] sm:$0xf]
          %v338 = vld [vmem:[%s271] sm:$0xf]
          %v339 = vld [vmem:[%s271 + $0x4] sm:$0xf]
          %v340 = vld [vmem:[#allocation2] sm:$0xff]
          %v343 = vunpack.c.l.b16 %v336
          %v344 = vunpack.c.l.b16 %v337
          %v345 = vpack.c.b16 %v344, %v343
          %347 = vmatprep.subr.bf16.mxu0 0
          %348 = vmatpush1.bf16.xpose.msra.mxu0 %v345
          %349 = vmatprep.subr.bf16.mxu0 0
          %350 = vmatpush1.bf16.xpose.msra.mxu0 0
          %351 = vmatprep.subr.bf16.mxu0 0
          %352 = vmatpush1.bf16.xpose.msra.mxu0 0
          %353 = vmatprep.subr.bf16.mxu0 0
          %354 = vmatpush1.bf16.xpose.msra.mxu0 0
          %355 = vmatprep.subr.bf16.mxu0 0
          %356 = vmatpush1.bf16.xpose.msra.mxu0 0
          %357 = vmatprep.subr.bf16.mxu0 0
          %358 = vmatpush1.bf16.xpose.msra.mxu0 0
          %359 = vmatprep.subr.bf16.mxu0 0
          %360 = vmatpush1.bf16.xpose.msra.mxu0 0
          %361 = vmatprep.subr.bf16.mxu0 0
          %362 = vmatpush1.bf16.xpose.msra.mxu0 0
          %363 = vmatprep.subr.bf16.mxu0 0
          %364 = vmatpush1.bf16.xpose.msra.mxu0 0
          %365 = vmatprep.subr.bf16.mxu0 0
          %366 = vmatpush1.bf16.xpose.msra.mxu0 0
          %367 = vmatprep.subr.bf16.mxu0 0
          %368 = vmatpush1.bf16.xpose.msra.mxu0 0
          %369 = vmatprep.subr.bf16.mxu0 0
          %370 = vmatpush1.bf16.xpose.msra.mxu0 0
          %371 = vmatprep.subr.bf16.mxu0 0
          %372 = vmatpush1.bf16.xpose.msra.mxu0 0
          %373 = vmatprep.subr.bf16.mxu0 0
          %374 = vmatpush1.bf16.xpose.msra.mxu0 0
          %375 = vmatprep.subr.bf16.mxu0 0
          %376 = vmatpush1.bf16.xpose.msra.mxu0 0
          %377 = vmatprep.subr.bf16.mxu0 0
          %378 = vmatpush1.bf16.xpose.msra.mxu0 0
          %379 = vmatprep.mubr.bf16.mxu0 0
          %380 = vmatmul.mubr.bf16.gmra.mrb[0].mxu0 %v340
          %v381 = vpop.f32.mrb[0].mxu0
          %v382 = vadd.f32 0.0, %v381
          %v383 = vpop.f32.mrb[0].mxu0
          %v384 = vpop.f32.mrb[0].mxu0
          %v385 = vadd.f32 0.0, %v384
          %v386 = vpop.f32.mrb[0].mxu0
          %387 = vdwg.mxu0
          %s388 = sld [smem:[#allocation7 + %s33]]
          %v389 = vlaneseq
          %v390 = vand.u32 %v389, 127
          %v391 = vstv %s329
          %v392 = vadd.s32 %v391, %v390
          %v393 = vstv %s388
          %vm394 = vcmp.lt.s32.totalorder %v392, %v393
          %v395 = vsel %vm394, %v382, -1000000.0
          %v396 = vsel %vm394, %v385, -1000000.0
          %v397 = vld [vmem:[#allocation3] sm:$0xff]
          %v398 = vld [vmem:[#allocation3 + $0x8] sm:$0xff]
          %vm399 = vcmask 130048
          %v400 = vsel %vm399, %v395, -inf
          %401 = vmax.xlane.f32.xlu0 %v400
          %v402 = vpop.xlane.xlu0 %401
          %v403 = vsel %vm399, %v396, -inf
          %404 = vmax.xlane.f32.xlu0 %v403
          %v405 = vpop.xlane.xlu0 %404
          %v406 = vmax.f32 %v397, %v402
          %v407 = vmax.f32 %v398, %v405
          %v408 = vsub.f32 %v397, %v406
          %v409 = vsub.f32 %v398, %v407
          %v410 = vmul.f32 %v408, 1.442695
          %v411 = vpow.pop %v410
          %v412 = vmul.f32 %v409, 1.442695
          %v413 = vpow.pop %v412
          %415 = vset.pattern.permute.xlu0 0
          %416 = vperm.xlu0 %415, %v406
          %v417 = vpop.permute.xlu0 %416
          %420 = vset.pattern.permute.xlu0 0
          %421 = vperm.xlu0 %420, %v407
          %v422 = vpop.permute.xlu0 %421
          %v424 = vsub.f32 %v395, %v417
          %v425 = vsub.f32 %v396, %v422
          %v426 = vmul.f32 %v424, 1.442695
          %v427 = vpow.pop %v426
          %v428 = vmul.f32 %v425, 1.442695
          %v429 = vpow.pop %v428
          %v430 = vld [vmem:[#allocation4] sm:$0xff]
          %v431 = vld [vmem:[#allocation4 + $0x8] sm:$0xff]
          %v432 = vmul.f32 %v411, %v430
          %v433 = vmul.f32 %v413, %v431
          %v434 = vsel %vm399, %v427, 0.0
          %435 = vadd.xlane.f32.xlu0 %v434
          %v436 = vpop.xlane.xlu0 %435
          %v437 = vsel %vm399, %v429, 0.0
          %438 = vadd.xlane.f32.xlu0 %v437
          %v439 = vpop.xlane.xlu0 %438
          %v440 = vadd.f32 %v432, %v436
          %v441 = vadd.f32 %v433, %v439
          %vm442 = vcmask 7168
          %443 = vst.msk [vmem:[#allocation4] sm:$0xff] %vm442, %v440
          %444 = vst.msk [vmem:[#allocation4 + $0x8] sm:$0xff] %vm442, %v441
          %v445 = vld [vmem:[#allocation5] sm:$0xff]
          %v446 = vld [vmem:[#allocation5 + $0x8] sm:$0xff]
          %448 = vset.pattern.permute.xlu0 0
          %449 = vperm.xlu0 %448, %v411
          %v450 = vpop.permute.xlu0 %449
          %453 = vset.pattern.permute.xlu0 0
          %454 = vperm.xlu0 %453, %v413
          %v455 = vpop.permute.xlu0 %454
          %v457 = vmul.f32 %v450, %v445
          %v458 = vmul.f32 %v455, %v446
          %v459 = vpack.c.bf16 %v429, %v427
          %v462 = vunpack.c.l.b16 %v338
          %v463 = vunpack.c.l.b16 %v339
          %v464 = vpack.c.b16 %v463, %v462
          %v467 = vsel %vm399, %v459, 0
          %469 = vmatprep.subr.bf16.mxu0 0
          %470 = vmatpush1.bf16.msra.mxu0 %v464
          %471 = vmatprep.subr.bf16.mxu0 0
          %472 = vmatpush1.bf16.msra.mxu0 0
          %473 = vmatprep.subr.bf16.mxu0 0
          %474 = vmatpush1.bf16.msra.mxu0 0
          %475 = vmatprep.subr.bf16.mxu0 0
          %476 = vmatpush1.bf16.msra.mxu0 0
          %477 = vmatprep.subr.bf16.mxu0 0
          %478 = vmatpush1.bf16.msra.mxu0 0
          %479 = vmatprep.subr.bf16.mxu0 0
          %480 = vmatpush1.bf16.msra.mxu0 0
          %481 = vmatprep.subr.bf16.mxu0 0
          %482 = vmatpush1.bf16.msra.mxu0 0
          %483 = vmatprep.subr.bf16.mxu0 0
          %484 = vmatpush1.bf16.msra.mxu0 0
          %485 = vmatprep.subr.bf16.mxu0 0
          %486 = vmatpush1.bf16.msra.mxu0 0
          %487 = vmatprep.subr.bf16.mxu0 0
          %488 = vmatpush1.bf16.msra.mxu0 0
          %489 = vmatprep.subr.bf16.mxu0 0
          %490 = vmatpush1.bf16.msra.mxu0 0
          %491 = vmatprep.subr.bf16.mxu0 0
          %492 = vmatpush1.bf16.msra.mxu0 0
          %493 = vmatprep.subr.bf16.mxu0 0
          %494 = vmatpush1.bf16.msra.mxu0 0
          %495 = vmatprep.subr.bf16.mxu0 0
          %496 = vmatpush1.bf16.msra.mxu0 0
          %497 = vmatprep.subr.bf16.mxu0 0
          %498 = vmatpush1.bf16.msra.mxu0 0
          %499 = vmatprep.subr.bf16.mxu0 0
          %500 = vmatpush1.bf16.msra.mxu0 0
          %501 = vmatprep.mubr.bf16.mxu0 0
          %502 = vmatmul.mubr.bf16.gmra.mrb[0].mxu0 %v467
          %v503 = vpop.f32.mrb[0].mxu0
          %v504 = vadd.f32 0.0, %v503
          %v505 = vpop.f32.mrb[0].mxu0
          %v506 = vpop.f32.mrb[0].mxu0
          %v507 = vadd.f32 0.0, %v506
          %v508 = vpop.f32.mrb[0].mxu0
          %509 = vdwg.mxu0
          %v510 = vadd.f32 %v457, %v504
          %v511 = vadd.f32 %v458, %v507
          %512 = vst [vmem:[#allocation5] sm:$0xff] %v510
          %513 = vst [vmem:[#allocation5 + $0x8] sm:$0xff] %v511
          %514 = vst.msk [vmem:[#allocation3] sm:$0xff] %vm442, %v406
          %515 = vst.msk [vmem:[#allocation3 + $0x8] sm:$0xff] %vm442, %v407
        $region52: #{tpu_custom_call.1} parent=31 // pred_fallthru
          _
        // Predicated region
        $region53: #{tpu_custom_call.1} parent=31 // pred_check
          %p516 = pneg %p309
        $region54: #{tpu_custom_call.1} parent=31 // pred_check_branch
          %518 = sbr.rel (%p516) target = $region56
        $region55: #{tpu_custom_call.1} parent=31 // pred_region
          %v519 = vld [vmem:[#allocation4] sm:$0xff]
          %v520 = vld [vmem:[#allocation4 + $0x8] sm:$0xff]
          %v521 = vrcp.pop %v519
          %v522 = vrcp.pop %v520
          %v523 = vld [vmem:[#allocation5] sm:$0xff]
          %v524 = vld [vmem:[#allocation5 + $0x8] sm:$0xff]
          %526 = vset.pattern.permute.xlu0 0
          %527 = vperm.xlu0 %526, %v521
          %v528 = vpop.permute.xlu0 %527
          %531 = vset.pattern.permute.xlu0 0
          %532 = vperm.xlu0 %531, %v522
          %v533 = vpop.permute.xlu0 %532
          %v535 = vmul.f32 %v523, %v528
          %v536 = vmul.f32 %v524, %v533
          %537 = vst [vmem:[%s303] sm:$0xff] %v535
          %538 = vst [vmem:[%s303 + $0x8] sm:$0xff] %v536
        $region56: #{tpu_custom_call.1} parent=31 // pred_fallthru
          _
        %s539 = sand.u32 %s141, 1
        %s540 = scalar_lea.sflag [#allocation10], %s539
        %s541 = sand.u32 %s141, 1
        %s542 = smul.addr %s541, 16
        %s543 = scalar_lea.vmem [#allocation14], %s542
        // Predicated region
        $region57: #{tpu_custom_call.1} parent=31 // pred_check
          %p544 = pneg %p151
        $region58: #{tpu_custom_call.1} parent=31 // pred_check_branch
          %546 = sbr.rel (%p544) target = $region60
        $region59: #{tpu_custom_call.1} parent=31 // pred_region
          %s547 = smul.u32 2, %s34
          %s549 = ssub.s32 256, 256
          %550 = vsyncadd %s540, %s549
          %s551 = smul.addr %s33, 2
          %s552 = sadd.s32 %s547, %s551
          %s553 = smul.addr %s552, 128
          %s554 = scalar_lea.hbm %s4, %s553
          %s555 = sshll.u32 %s543, 4
          %s556 = int_to_ptr.vmem [resolvable:$true] %s555
          %561 = dma.vmem_to_hbm [thread:$0]  %s556, 256, %s554, %s540, 128, 128, 8
        $region60: #{tpu_custom_call.1} parent=31 // pred_fallthru
          _
      $region32: #{tpu_custom_call.1} parent=5 // pred_fallthru
        _
      %p562 = scmp.le.s32.totalorder 2, %s23
      // Predicated region
      $region61: #{tpu_custom_call.1} parent=5 // pred_check
        %p563 = pneg %p562
      $region62: #{tpu_custom_call.1} parent=5 // pred_check_branch
        %565 = sbr.rel (%p563) target = $region64
      $region63: #{tpu_custom_call.1} parent=5 // pred_region
        %s566 = ssub.s32 %s23, 2
        // Predicated region
        $region65: #{tpu_custom_call.1} parent=63 // pred_check
          %p567 = pneg %p157
        $region66: #{tpu_custom_call.1} parent=63 // pred_check_branch
          %569 = sbr.rel (%p567) target = $region68
        $region67: #{tpu_custom_call.1} parent=63 // pred_region
          %s570 = sand.u32 %s142, 1
          %s571 = scalar_lea.sflag [#allocation10], %s570
          %s572 = sand.u32 %s142, 1
          %s573 = smul.addr %s572, 16
          %s574 = scalar_lea.vmem [#allocation14], %s573
          %575 = dma.done %s571, 256
        $region68: #{tpu_custom_call.1} parent=63 // pred_fallthru
          _
      $region64: #{tpu_custom_call.1} parent=5 // pred_fallthru
        _
    $region6: #{tpu_custom_call.1} parent=1 // loop_footer
      %s27 = sadd.s32 1, %s23
    $region7: #{tpu_custom_call.1} parent=1 // loop_footer_branch
      %22 = sbr.rel target = $region3
    $region8: #{tpu_custom_call.1} parent=1 // loop_exit
      _
    %576 = vsyncpa [#allocation9], 1
    %s577 = scalar_lea.sflag [#allocation9], 1
    %578 = vsyncpa %s577, 1
    %579 = vsyncpa [#allocation12], 1
    %s580 = scalar_lea.sflag [#allocation12], 1
    %581 = vsyncpa %s580, 1
    %582 = vsyncpa [#allocation10], 1
    %s583 = scalar_lea.sflag [#allocation10], 1
    %584 = vsyncpa %s583, 1

</llo_original>
